<compile_context>
chip_gen: v5e
topology: v5e:2x2
jax: 0.10.0
libtpu: 0.0.40
codegen_flags: <defaults>
</compile_context>

<pallas_src>
import functools

import jax
import jax.numpy as jnp
from jax.experimental import pallas as pl
from jax.experimental.pallas import tpu as pltpu

_LANE = 128
_VMEM_LIMIT = 48 * 1024 * 1024        # scoped VMEM limit handed to Mosaic
_TILE_BUDGET = 32 * 1024 * 1024       # conservative tile-buffer budget (v7x-safe)


def _round_up(v, m):
    return ((v + m - 1) // m) * m


def _pick_tile(total, cap, unit=_LANE):
    """Largest multiple of `unit` that divides `total` and is <= cap."""
    cap = max(unit, min(cap, total))
    t = (cap // unit) * unit
    while t > unit and total % t != 0:
        t -= unit
    return t


# ----------------------------------------------------------------------------
# Kernels
# ----------------------------------------------------------------------------
def _ds_us_kernel_full_k(x_ref, m_ref, o_ref):
    """Plan A: one full-K dot per (i, j) tile; no accumulator round-trip.

    x_ref: (tm, Np)  original dtype (cast in-kernel)
    m_ref: (Np, tn)  operand dtype (pre-transposed M)
    o_ref: (tm, tn)
    """
    o_ref[...] = jnp.dot(
        x_ref[...].astype(m_ref.dtype),
        m_ref[...],
        preferred_element_type=jnp.float32,
    ).astype(o_ref.dtype)


def _ds_us_kernel_x_resident(x_ref, m_ref, o_ref, acc_ref):
    """Plan B: x row-slab resident; M streamed in (tk, tn) tiles; f32 acc.

    x_ref  : (tm, Np)   resident across j/k (block index (i, 0))
    m_ref  : (tk, tn)
    o_ref  : (tm, tn)
    acc_ref: (tm, tn) f32 scratch
    """
    k = pl.program_id(2)
    tk = m_ref.shape[0]

    @pl.when(k == 0)
    def _():
        acc_ref[...] = jnp.zeros_like(acc_ref)

    off = pl.multiple_of(k * tk, _LANE)
    xk = x_ref[:, pl.ds(off, tk)].astype(m_ref.dtype)
    acc_ref[...] += jnp.dot(xk, m_ref[...], preferred_element_type=jnp.float32)

    @pl.when(k == pl.num_programs(2) - 1)
    def _():
        o_ref[...] = acc_ref[...].astype(o_ref.dtype)


def _ds_us_kernel_tiled(x_ref, m_ref, o_ref, acc_ref):
    """Plan C: fully tiled fallback (tm, tk) x (tk, tn) with f32 acc over k."""
    k = pl.program_id(2)

    @pl.when(k == 0)
    def _():
        acc_ref[...] = jnp.zeros_like(acc_ref)

    acc_ref[...] += jnp.dot(
        x_ref[...].astype(m_ref.dtype),
        m_ref[...],
        preferred_element_type=jnp.float32,
    )

    @pl.when(k == pl.num_programs(2) - 1)
    def _():
        o_ref[...] = acc_ref[...].astype(o_ref.dtype)


# ----------------------------------------------------------------------------
# Forward implementation (traced under jit; all plan/tile decisions are static)
# ----------------------------------------------------------------------------
def _ds_us_forward_impl(x, Mt, *, n_out, force_plan=None):
    B, C, N = x.shape
    Np, Nop = Mt.shape
    BC = B * C
    out_dtype = x.dtype

    xi = x.dtype.itemsize
    mi = Mt.dtype.itemsize
    oi = jnp.dtype(out_dtype).itemsize

    # Row tile: cover all B*C rows in one tile when reasonable so M is only
    # streamed once per forward call (i-grid == 1 for realistic batches).
    row_align = max(8, 32 // min(xi, oi))
    tm = min(_round_up(BC, row_align), 512)
    BCp = _round_up(BC, tm)

    # Output-vertex tile: large & lane-dense, but keep >= 2 j-tiles when
    # possible so both v7x TensorCores get work (i-grid is typically 1).
    tn = _pick_tile(Nop, 512)
    if Nop // tn < 2 and Nop > _LANE:
        tn = _pick_tile(Nop, Nop // 2)

    x2 = x.reshape(BC, N)
    if (BCp, Np) != (BC, N):
        x2 = jnp.pad(x2, ((0, BCp - BC), (0, Np - N)))

    n_i, n_j = BCp // tm, Nop // tn

    # ---- plan selection under a conservative double-buffered VMEM budget ----
    bytes_a = 2 * tm * Np * xi + 2 * Np * tn * mi + 2 * tm * tn * oi
    tk_b = _pick_tile(Np, 2048)
    bytes_b = 2 * tm * Np * xi + 2 * tk_b * tn * mi + 2 * tm * tn * oi + tm * tn * 4
    tk_c = _pick_tile(Np, 1024)

    plan = force_plan
    if plan is None:
        if bytes_a <= _TILE_BUDGET:
            plan = "A"
        elif bytes_b <= _TILE_BUDGET:
            plan = "B"
        else:
            plan = "C"

    # Advisory cost estimate (accounts for operand re-streaming of the plan).
    flops = 2 * BCp * Np * Nop
    x_reads = n_j if plan == "C" else 1
    cost = pl.CostEstimate(
        flops=int(flops),
        transcendentals=0,
        bytes_accessed=int(x_reads * BCp * Np * xi + n_i * Np * Nop * mi
                           + BCp * Nop * oi),
    )

    if plan == "A":
        out_p = pl.pallas_call(
            _ds_us_kernel_full_k,
            out_shape=jax.ShapeDtypeStruct((BCp, Nop), out_dtype),
            grid_spec=pltpu.PrefetchScalarGridSpec(
                num_scalar_prefetch=0,
                grid=(n_i, n_j),
                in_specs=[
                    pl.BlockSpec((tm, Np), lambda i, j: (i, 0)),   # x row-slab
                    pl.BlockSpec((Np, tn), lambda i, j: (0, j)),   # M col-slab
                ],
                out_specs=pl.BlockSpec((tm, tn), lambda i, j: (i, j)),
            ),
            compiler_params=pltpu.CompilerParams(
                dimension_semantics=("parallel", "parallel"),
                vmem_limit_bytes=_VMEM_LIMIT,
            ),
            cost_estimate=cost,
        )(x2, Mt)
    elif plan == "B":
        n_k = Np // tk_b
        out_p = pl.pallas_call(
            _ds_us_kernel_x_resident,
            out_shape=jax.ShapeDtypeStruct((BCp, Nop), out_dtype),
            grid_spec=pltpu.PrefetchScalarGridSpec(
                num_scalar_prefetch=0,
                grid=(n_i, n_j, n_k),
                in_specs=[
                    pl.BlockSpec((tm, Np), lambda i, j, k: (i, 0)),    # resident
                    pl.BlockSpec((tk_b, tn), lambda i, j, k: (k, j)),  # streamed
                ],
                out_specs=pl.BlockSpec((tm, tn), lambda i, j, k: (i, j)),
                scratch_shapes=[pltpu.VMEM((tm, tn), jnp.float32)],
            ),
            compiler_params=pltpu.CompilerParams(
                dimension_semantics=("parallel", "parallel", "arbitrary"),
                vmem_limit_bytes=_VMEM_LIMIT,
            ),
            cost_estimate=cost,
        )(x2, Mt)
    else:  # plan == "C"
        n_k = Np // tk_c
        out_p = pl.pallas_call(
            _ds_us_kernel_tiled,
            out_shape=jax.ShapeDtypeStruct((BCp, Nop), out_dtype),
            grid_spec=pltpu.PrefetchScalarGridSpec(
                num_scalar_prefetch=0,
                grid=(n_i, n_j, n_k),
                in_specs=[
                    pl.BlockSpec((tm, tk_c), lambda i, j, k: (i, k)),
                    pl.BlockSpec((tk_c, tn), lambda i, j, k: (k, j)),
                ],
                out_specs=pl.BlockSpec((tm, tn), lambda i, j, k: (i, j)),
                scratch_shapes=[pltpu.VMEM((tm, tn), jnp.float32)],
            ),
            compiler_params=pltpu.CompilerParams(
                dimension_semantics=("parallel", "parallel", "arbitrary"),
                vmem_limit_bytes=_VMEM_LIMIT,
            ),
            cost_estimate=cost,
        )(x2, Mt)

    return out_p[:BC, :n_out].reshape(B, C, n_out)


# ----------------------------------------------------------------------------
# Public API: mirrors ds_us(M) -> module; returned callable mirrors forward(x).
# ----------------------------------------------------------------------------
def make_ds_us(M, *, operand_dtype=jnp.bfloat16, force_plan=None):
    """Build a ds_us forward fn. M: (N_out, N); x: (B, C, N) -> (B, C, N_out).

    M is cast / zero-padded / transposed to MXU-native (Np, Nop) layout ONCE
    here (it is a static sampling operator), never per forward call.
    """
    M = jnp.asarray(M)
    N_out, N = M.shape
    Np = _round_up(N, _LANE)
    Nop = _round_up(N_out, _LANE)
    Mt = jnp.pad(M, ((0, Nop - N_out), (0, Np - N))).T.astype(operand_dtype)
    Mt = jax.block_until_ready(Mt)

    fwd = jax.jit(functools.partial(_ds_us_forward_impl, n_out=N_out,
                                    force_plan=force_plan))
    return lambda x: fwd(x, Mt)


if __name__ == "__main__":
    # Small shapes consistent with the module: x is B*C*N, M is (N_out, N).
    B, C, N, N_out = 2, 4, 16, 8

    key = jax.random.PRNGKey(0)
    kx, kmv, kmm = jax.random.split(key, 3)

    x = jax.random.normal(kx, (B, C, N), dtype=jnp.float32)

    # Dense representation of the sparse up/down-sampling matrix (mostly zeros).
    M_vals = jax.random.normal(kmv, (N_out, N), dtype=jnp.float32)
    mask = (jax.random.uniform(kmm, (N_out, N)) < 0.25).astype(jnp.float32)
    M = M_vals * mask

    ref = jnp.einsum("on,bcn->bco", M, x)

    # f32 operand path (default plan A here): tight check against the reference.
    fwd_f32 = make_ds_us(M, operand_dtype=jnp.float32)
    out_f32 = jax.block_until_ready(fwd_f32(x))
    assert out_f32.shape == (B, C, N_out)
    assert jnp.allclose(out_f32, ref, atol=1e-4, rtol=1e-4), "f32 path mismatch"

    # bf16 operand / f32 accumulation path (default, faster): looser tolerance.
    fwd_bf16 = make_ds_us(M, operand_dtype=jnp.bfloat16)
    out_bf16 = jax.block_until_ready(fwd_bf16(x))
    assert out_bf16.shape == (B, C, N_out)
    assert jnp.allclose(out_bf16, ref, atol=5e-2, rtol=5e-2), "bf16 path mismatch"

    # Exercise the large-mesh plans (B: x-resident + K streaming, C: fully
    # tiled fallback) on the same data to validate all code paths.
    out_b = jax.block_until_ready(make_ds_us(M, operand_dtype=jnp.float32,
                                             force_plan="B")(x))
    out_c = jax.block_until_ready(make_ds_us(M, operand_dtype=jnp.float32,
                                             force_plan="C")(x))
    assert jnp.allclose(out_b, ref, atol=1e-4, rtol=1e-4), "plan B mismatch"
    assert jnp.allclose(out_c, ref, atol=1e-4, rtol=1e-4), "plan C mismatch"

    print("KERNEL_OK")
</pallas_src>

<mosaic_0001>
module attributes {stable_mosaic.version = 11 : i64} {
  func.func @_ds_us_kernel_full_k(%arg0: i32, %arg1: i32, %arg2: memref<8x128xf32, #tpu.memory_space<vmem>>, %arg3: memref<128x128xf32, #tpu.memory_space<vmem>>, %arg4: memref<8x128xf32, #tpu.memory_space<vmem>>) attributes {dimension_semantics = [#tpu.dimension_semantics<parallel>, #tpu.dimension_semantics<parallel>], iteration_bounds = array<i64: 1, 1>, scalar_prefetch = 0 : i64, scratch_operands = 0 : i64, tpu.core_type = #tpu.core_type<tc>, window_params = [{transform_indices = @transform_0, window_bounds = array<i64: 8, 128>}, {transform_indices = @transform_1, window_bounds = array<i64: 128, 128>}, {transform_indices = @transform_2, window_bounds = array<i64: 8, 128>}]} {
    %c0 = arith.constant 0 : index
    %c0_0 = arith.constant 0 : index
    %0 = vector.load %arg2[%c0, %c0_0] : memref<8x128xf32, #tpu.memory_space<vmem>>, vector<8x128xf32>
    %c0_1 = arith.constant 0 : index
    %c0_2 = arith.constant 0 : index
    %1 = vector.load %arg3[%c0_1, %c0_2] : memref<128x128xf32, #tpu.memory_space<vmem>>, vector<128x128xf32>
    %cst = arith.constant dense<0.000000e+00> : vector<8x128xf32>
    %2 = tpu.matmul %0, %1, %cst {dimension_numbers = #tpu.dot_dimension_numbers<[1], [0], [0], [1], [0, 0, 1, 1], [], []>} : vector<8x128xf32>, vector<128x128xf32>, vector<8x128xf32> -> vector<8x128xf32>
    %c0_3 = arith.constant 0 : index
    %c0_4 = arith.constant 0 : index
    %3 = vector.load %arg4[%c0_3, %c0_4] : memref<8x128xf32, #tpu.memory_space<vmem>>, vector<8x128xf32>
    tpu.vector_store %arg4[%c0_3, %c0_4], %2 {strides = array<i32>} : memref<8x128xf32, #tpu.memory_space<vmem>>, vector<8x128xf32>,
    return
  }
  func.func @transform_0(%arg0: i32, %arg1: i32) -> (i32, i32) {
    %c0_i32 = arith.constant 0 : i32
    %c0_i32_0 = arith.constant 0 : i32
    return %arg0, %c0_i32 : i32, i32
  }
  func.func @transform_1(%arg0: i32, %arg1: i32) -> (i32, i32) {
    %c0_i32 = arith.constant 0 : i32
    %c0_i32_0 = arith.constant 0 : i32
    return %c0_i32, %arg1 : i32, i32
  }
  func.func @transform_2(%arg0: i32, %arg1: i32) -> (i32, i32) {
    %c0_i32 = arith.constant 0 : i32
    return %arg0, %arg1 : i32, i32
  }
}

</mosaic_0001>

<llo_original>
// kernel: _ds_us_forward_impl.1
$region0: #{_ds_us_forward_impl.1}
  #allocation0 [shape = 'u32[]', space=smem, size = 0x4, offset = 0x4, fixed_abs, tag = 'smem constant byte address 0x4 - core index']
  #allocation1 [shape = 'u32[72,128]{1,0:T(1,128)}', space=vmem, size = 0x9000, scoped, tag = 'internal scratch']
  %s0 = inlined_call_operand.vmem [shape: f32[8,128], index: 0, kind: input, shape index: {}]
  %s1 = inlined_call_operand.hbm [shape: f32[128,128], index: 1, kind: input, shape index: {}]
  %s2 = inlined_call_operand.hbm [shape: f32[8,128], index: 2, kind: output, shape index: {}]
  %s3 = sld [smem:[#allocation0]]
  $region22: #{_ds_us_forward_impl.1} parent=0
    _
  %s5 = ssub.s32 1, %s3
  %s6 = scalar_select 0, %s5, %s3
  $region1: #{_ds_us_forward_impl.1} parent=0
    #allocation2 [shape = 'u8[65536]{0}', space=vmem, size = 0x10000, scoped, tag = 'input window, operand 1, single buffered']
    #allocation3 [shape = 's32[1]{0}', space=sflag, size = 0x4, scoped, tag = 'scoped memory for _ds_us_forward_impl.1']
    #allocation4 [shape = 's32[1]{0}', space=sflag, size = 0x4, scoped, tag = 'scoped memory for _ds_us_forward_impl.1']
    #allocation5 [shape = 'u8[4096]{0}', space=vmem, size = 0x1000, scoped, tag = 'output window, operand 0, single buffered']
    %7 = vsyncpa [#allocation3], 0
    %8 = vsyncpa [#allocation4], 0
    // Predicated region
    $region2: #{_ds_us_forward_impl.1} parent=1 // pred_check
      _
    $region3: #{_ds_us_forward_impl.1} parent=1 // pred_check_branch
      %10 = sbr.rel (0) target = $region5
    $region4: #{_ds_us_forward_impl.1} parent=1 // pred_region
      _
    $region5: #{_ds_us_forward_impl.1} parent=1 // pred_fallthru
      _
    // Predicated region
    $region6: #{_ds_us_forward_impl.1} parent=1 // pred_check
      _
    $region7: #{_ds_us_forward_impl.1} parent=1 // pred_check_branch
      %12 = sbr.rel (0) target = $region9
    $region8: #{_ds_us_forward_impl.1} parent=1 // pred_region
      %14 = vsyncadd [#allocation3], 0
      %s15 = sshll.u32 %s1, 4
      %s16 = int_to_ptr.hbm [resolvable:$true] %s15
      %s17 = sshll.u32 [#allocation2], 4
      %s18 = int_to_ptr.vmem [resolvable:$true] %s17
      %23 = dma.hbm_to_vmem [thread:$0]  %s16, 2048, %s18, [#allocation3], 128, 128, 8
    $region9: #{_ds_us_forward_impl.1} parent=1 // pred_fallthru
      _
    // Predicated region
    $region10: #{_ds_us_forward_impl.1} parent=1 // pred_check
      _
    $region11: #{_ds_us_forward_impl.1} parent=1 // pred_check_branch
      %25 = sbr.rel (0) target = $region13
    $region12: #{_ds_us_forward_impl.1} parent=1 // pred_region
      %27 = dma.done [#allocation3], 2048
    $region13: #{_ds_us_forward_impl.1} parent=1 // pred_fallthru
      _
    %v28 = vld [vmem:[%s0] sm:$0xff]
    %v29 = vld [vmem:[#allocation2] sm:$0xff]
    %v30 = vld [vmem:[#allocation2 + $0x8] sm:$0xff]
    %v31 = vld [vmem:[#allocation2 + $0x10] sm:$0xff]
    %v32 = vld [vmem:[#allocation2 + $0x18] sm:$0xff]
    %v33 = vld [vmem:[#allocation2 + $0x20] sm:$0xff]
    %v34 = vld [vmem:[#allocation2 + $0x28] sm:$0xff]
    %v35 = vld [vmem:[#allocation2 + $0x30] sm:$0xff]
    %v36 = vld [vmem:[#allocation2 + $0x38] sm:$0xff]
    %v37 = vld [vmem:[#allocation2 + $0x40] sm:$0xff]
    %v38 = vld [vmem:[#allocation2 + $0x48] sm:$0xff]
    %v39 = vld [vmem:[#allocation2 + $0x50] sm:$0xff]
    %v40 = vld [vmem:[#allocation2 + $0x58] sm:$0xff]
    %v41 = vld [vmem:[#allocation2 + $0x60] sm:$0xff]
    %v42 = vld [vmem:[#allocation2 + $0x68] sm:$0xff]
    %v43 = vld [vmem:[#allocation2 + $0x70] sm:$0xff]
    %v44 = vld [vmem:[#allocation2 + $0x78] sm:$0xff]
    %45 = vmatpush.msra.mxu0 %v44
    %46 = vmatpush.msra.mxu0 %v43
    %47 = vmatpush.msra.mxu0 %v42
    %48 = vmatpush.msra.mxu0 %v41
    %49 = vmatpush.msra.mxu0 %v40
    %50 = vmatpush.msra.mxu0 %v39
    %51 = vmatpush.msra.mxu0 %v38
    %52 = vmatpush.msra.mxu0 %v37
    %53 = vmatpush.msra.mxu0 %v36
    %54 = vmatpush.msra.mxu0 %v35
    %55 = vmatpush.msra.mxu0 %v34
    %56 = vmatpush.msra.mxu0 %v33
    %57 = vmatpush.msra.mxu0 %v32
    %58 = vmatpush.msra.mxu0 %v31
    %59 = vmatpush.msra.mxu0 %v30
    %60 = vmatpush.msra.mxu0 %v29
    %61 = vmatmul.f32.gmra.mxu0 %v28
    %v62 = vpop.f32.mrf.mxu0
    %v63 = vadd.f32 0.0, %v62
    %64 = vdwg.mxu0
    %65 = vst [vmem:[#allocation5] sm:$0xff] %v63
    // Predicated region
    $region14: #{_ds_us_forward_impl.1} parent=1 // pred_check
      _
    $region15: #{_ds_us_forward_impl.1} parent=1 // pred_check_branch
      %67 = sbr.rel (0) target = $region17
    $region16: #{_ds_us_forward_impl.1} parent=1 // pred_region
      %69 = vsyncadd [#allocation4], 0
      %s71 = sshll.u32 [#allocation5], 4
      %s72 = int_to_ptr.vmem [resolvable:$true] %s71
      %s73 = sshll.u32 %s2, 4
      %s74 = int_to_ptr.hbm [resolvable:$true] %s73
      %76 = dma.vmem_to_hbm [thread:$0]  %s72, 128, %s74, [#allocation4]
    $region17: #{_ds_us_forward_impl.1} parent=1 // pred_fallthru
      _
    // Predicated region
    $region18: #{_ds_us_forward_impl.1} parent=1 // pred_check
      _
    $region19: #{_ds_us_forward_impl.1} parent=1 // pred_check_branch
      %78 = sbr.rel (0) target = $region21
    $region20: #{_ds_us_forward_impl.1} parent=1 // pred_region
      %80 = dma.done [#allocation4], 128
    $region21: #{_ds_us_forward_impl.1} parent=1 // pred_fallthru
      _
    %81 = vsyncpa [#allocation3], 1
    %82 = vsyncpa [#allocation4], 1

</llo_original>
